<compile_context>
chip_gen: v7x
topology: tpu7x:2x2x1
jax: 0.10.0
libtpu: 0.0.40
codegen_flags: <defaults>
</compile_context>

<pallas_src>
import functools

import jax
import jax.numpy as jnp
from jax.experimental import pallas as pl
from jax.experimental.pallas import tpu as pltpu

# 32 MiB is safe on every current generation (v5e/v6e: 128 MiB physical,
# v7x: 64 MiB physical / 32 MiB scoped default) while giving v5e headroom
# over its 16 MiB scoped default.
_VMEM_LIMIT_BYTES = 32 * 1024 * 1024
# Conservative budget used when picking the hidden tile width tn.
_TILE_VMEM_BUDGET = 8 * 1024 * 1024


def _round_up(x, m):
    return ((x + m - 1) // m) * m


def _activate(acc, activation):
    if activation == "tanh":
        return jnp.tanh(acc)
    if activation == "relu":
        return jnp.maximum(acc, 0.0)
    if activation == "identity":   # internal use only (hoisted x-projection)
        return acc
    raise ValueError(f"Unknown nonlinearity: {activation}")


# --------------------------------------------------------------------------
# One-time parameter preparation (hoisted out of the per-call hot path).
# --------------------------------------------------------------------------
def prepare_rnn_cell_params(w_xh, w_hh, b_xh, b_hh, *, nonlinearity="tanh",
                            compute_dtype=jnp.bfloat16):
    """Pre-transpose / pad / fuse parameters once.

    w_xh: (hidden, input)   -- PyTorch nn.Linear weight layout
    w_hh: (hidden, hidden)
    b_xh, b_hh: (hidden,)
    compute_dtype: MXU input dtype for weights/activations (default bf16;
                   accumulation, bias add and nonlinearity are always f32).
    """
    if nonlinearity not in ("tanh", "relu"):
        raise ValueError(f"Unknown nonlinearity: {nonlinearity}")
    hidden_size, input_size = w_xh.shape
    h_pad = _round_up(hidden_size, 128)  # lane-dense hidden axis (unmasked vst)

    def pad_cols(w):  # (K, hidden) -> (K, h_pad)
        return jnp.pad(w, ((0, 0), (0, h_pad - hidden_size)))

    w_x = pad_cols(w_xh.T).astype(compute_dtype)               # (input,  h_pad)
    w_h = pad_cols(w_hh.T).astype(compute_dtype)               # (hidden, h_pad)
    # (h_pad, h_pad); zero rows/cols keep the padded hidden columns exactly 0
    # through the recurrence (relies on f(0) == 0, true for tanh/relu).
    w_h_sq = jnp.pad(w_h, ((0, h_pad - hidden_size), (0, 0)))
    bias = jnp.pad((b_xh + b_hh).astype(jnp.float32),
                   (0, h_pad - hidden_size)).reshape(1, h_pad)

    # TODO(synk): on v5e/v6e an int8-quantized weight path (int MXU) would cut
    # HBM weight traffic another 2x for the bandwidth-bound per-step cell; the
    # v7x MXU dropped integer support so it is not a drop-in there.
    return dict(
        input_size=input_size, hidden_size=hidden_size, h_pad=h_pad,
        nonlinearity=nonlinearity, compute_dtype=compute_dtype,
        w_x=w_x, w_h=w_h, w_h_sq=w_h_sq, bias=bias,
    )


# --------------------------------------------------------------------------
# Fused linear (+ optional recurrent term) kernels, tiled over (rows, hidden).
# --------------------------------------------------------------------------
def _linear_kernel(x_ref, wx_ref, b_ref, o_ref, *, activation):
    acc = jnp.dot(x_ref[...], wx_ref[...], preferred_element_type=jnp.float32)
    acc = acc + b_ref[...]                          # (1, tn) broadcasts over rows
    o_ref[...] = _activate(acc, activation).astype(o_ref.dtype)


def _cell_kernel(x_ref, h_ref, wx_ref, wh_ref, b_ref, o_ref, *, activation):
    # Two MXU pushes into one f32 accumulator (same vmatmul count as a
    # stacked-K push, but no wrapper-side concat HBM round trip).
    acc = jnp.dot(x_ref[...], wx_ref[...], preferred_element_type=jnp.float32)
    acc = acc + jnp.dot(h_ref[...], wh_ref[...], preferred_element_type=jnp.float32)
    acc = acc + b_ref[...]
    o_ref[...] = _activate(acc, activation).astype(o_ref.dtype)


def _pick_tn(Hp, Kx, Kh, tm, w_isz, x_isz, o_isz, budget=_TILE_VMEM_BUDGET):
    """Largest hidden tile (multiple of 128) whose double-buffered working set
    fits the VMEM budget (keeps v5e's small scoped default happy)."""
    for tn in (512, 256, 128):
        if Hp % tn:
            continue
        need = 2 * ((Kx + Kh) * tn * w_isz      # weight tiles
                    + tm * (Kx + Kh) * x_isz    # x / h row tiles
                    + tm * tn * o_isz           # output tiles
                    + tn * 4)                   # bias
        if need <= budget:
            return tn
    return 128


def _pallas_linear(x, h, wx, wh, bias, *, activation, out_dtype):
    """y = act(x @ wx [+ h @ wh] + bias).

    x:  (M, Kx) in compute dtype, h: (M, Kh) or None, wx: (Kx, Hp),
    wh: (Kh, Hp), bias: (1, Hp) f32.  Returns (M, Hp) in out_dtype
    (internal row padding is sliced off, hidden padding is kept).
    """
    M, Kx = x.shape
    Hp = wx.shape[1]
    Kh = 0 if h is None else h.shape[1]
    w_isz = jnp.dtype(wx.dtype).itemsize
    x_isz = jnp.dtype(x.dtype).itemsize
    o_isz = jnp.dtype(out_dtype).itemsize
    sub = 16 if jnp.dtype(x.dtype) == jnp.dtype(jnp.bfloat16) else 8

    tm = 256 if M >= 256 else _round_up(M, sub)
    M_pad = _round_up(M, tm)
    tn = _pick_tn(Hp, Kx, Kh, tm, w_isz, x_isz, o_isz)
    # TODO(synk): for very large K (input+hidden) add an innermost "arbitrary"
    # K grid axis with an f32 VMEM accumulator (pl.when init/finalize) so the
    # (K, tn) weight block stays inside the v7x VMEM budget.

    if M_pad != M:
        x = jnp.pad(x, ((0, M_pad - M), (0, 0)))
        if h is not None:
            h = jnp.pad(h, ((0, M_pad - M), (0, 0)))

    n_rows, n_cols = M_pad // tm, Hp // tn

    # Put the larger operand on the OUTER grid axis so it is fetched once and
    # the smaller operand is the one re-fetched.  For the per-step cell
    # (small batch) that means weights constant over the inner (batch) axis.
    weight_bytes = (Kx + Kh) * Hp * w_isz
    row_bytes = M_pad * (Kx + Kh) * x_isz
    rows_inner = weight_bytes >= row_bytes
    if rows_inner:
        grid = (n_cols, n_rows)
        row_map = lambda j, i: (i, 0)
        col_map = lambda j, i: (0, j)
        out_map = lambda j, i: (i, j)
    else:
        grid = (n_rows, n_cols)
        row_map = lambda i, j: (i, 0)
        col_map = lambda i, j: (0, j)
        out_map = lambda i, j: (i, j)

    cost = pl.CostEstimate(
        flops=2 * M_pad * (Kx + Kh) * Hp,
        transcendentals=(M_pad * Hp) if activation == "tanh" else 0,
        bytes_accessed=(M_pad * (Kx + Kh) * x_isz + (Kx + Kh) * Hp * w_isz
                        + Hp * 4 + M_pad * Hp * o_isz))

    if h is None:
        kernel = functools.partial(_linear_kernel, activation=activation)
        in_specs = [
            pl.BlockSpec((tm, Kx), row_map),    # x rows
            pl.BlockSpec((Kx, tn), col_map),    # W_xh^T tile
            pl.BlockSpec((1, tn), col_map),     # fused bias
        ]
        args = (x, wx, bias)
    else:
        kernel = functools.partial(_cell_kernel, activation=activation)
        in_specs = [
            pl.BlockSpec((tm, Kx), row_map),    # x rows
            pl.BlockSpec((tm, Kh), row_map),    # h rows
            pl.BlockSpec((Kx, tn), col_map),    # W_xh^T tile
            pl.BlockSpec((Kh, tn), col_map),    # W_hh^T tile
            pl.BlockSpec((1, tn), col_map),     # fused bias
        ]
        args = (x, h, wx, wh, bias)

    out = pl.pallas_call(
        kernel,
        out_shape=jax.ShapeDtypeStruct((M_pad, Hp), out_dtype),
        grid=grid,
        in_specs=in_specs,
        out_specs=pl.BlockSpec((tm, tn), out_map),
        compiler_params=pltpu.CompilerParams(
            dimension_semantics=("parallel", "parallel"),
            vmem_limit_bytes=_VMEM_LIMIT_BYTES),
        cost_estimate=cost,
    )(*args)
    return out[:M]


# --------------------------------------------------------------------------
# Single-timestep RNNCell forward.
# --------------------------------------------------------------------------
def rnn_cell_forward(params, x, h=None):
    """Single RNNCell step. x: (B, input), h: (B, hidden) or None."""
    B = x.shape[0]
    H = params["hidden_size"]
    cd = params["compute_dtype"]
    act = params["nonlinearity"]

    if h is None:
        # init_hidden path: h == 0 -> skip the recurrent matmul entirely.
        out = _pallas_linear(x.astype(cd), None, params["w_x"], None,
                             params["bias"], activation=act, out_dtype=x.dtype)
    else:
        out = _pallas_linear(x.astype(cd), h.astype(cd), params["w_x"],
                             params["w_h"], params["bias"],
                             activation=act, out_dtype=x.dtype)
    return out[:, :H]


# --------------------------------------------------------------------------
# Whole-sequence kernel: x-projection hoisted, recurrence only in the loop.
# --------------------------------------------------------------------------
def _rnn_seq_kernel(xp_ref, h0_ref, wh_ref, o_ref, h_scratch, *, activation):
    t = pl.program_id(1)

    @pl.when(t == 0)
    def _():
        h_scratch[...] = h0_ref[...]          # f32 init per batch tile

    h_prev = h_scratch[...].astype(wh_ref.dtype)
    acc = xp_ref[0] + jnp.dot(h_prev, wh_ref[...],
                              preferred_element_type=jnp.float32)
    h_new = _activate(acc, activation)
    h_scratch[...] = h_new
    o_ref[0] = h_new.astype(o_ref.dtype)


def rnn_sequence_forward(params, x_seq, h0=None):
    """Apply the RNNCell over a whole sequence.

    x_seq: (T, B, input_size) -> (T, B, hidden_size) hidden states.

    The input projection (x @ W_xh^T + bias) is hoisted into ONE large Pallas
    matmul over all T*B rows; the recurrence kernel streams those pre-projected
    tiles, keeps W_hh^T VMEM-resident across T, and carries h in a VMEM
    scratch.  A leading batch-tile grid axis is marked "parallel" so v7x's
    second TensorCore can take half the batch.
    """
    T, B, Kx = x_seq.shape
    H = params["hidden_size"]
    Hp = params["h_pad"]
    cd = params["compute_dtype"]
    act = params["nonlinearity"]
    out_dtype = x_seq.dtype

    sub = 16 if jnp.dtype(cd) == jnp.dtype(jnp.bfloat16) else 8
    B_pad = _round_up(B, sub)

    x_p = jnp.pad(x_seq, ((0, 0), (0, B_pad - B), (0, 0))).astype(cd)

    # Hoisted input projection: one big (T*B_pad, Kx) @ (Kx, Hp) matmul with
    # the fused bias; stored in f32 so the per-step add is exact.
    x_pre = _pallas_linear(x_p.reshape(T * B_pad, Kx), None, params["w_x"],
                           None, params["bias"], activation="identity",
                           out_dtype=jnp.float32)
    x_pre = x_pre.reshape(T, B_pad, Hp)

    if h0 is None:
        h0_p = jnp.zeros((B_pad, Hp), jnp.float32)
    else:
        h0_p = jnp.pad(h0.astype(jnp.float32),
                       ((0, B_pad - B), (0, Hp - H)))

    wh = params["w_h_sq"]    # (Hp, Hp), zero rows/cols keep padded columns inert

    # Batch tiling: >1 tile lets the "parallel" outer axis use v7x's 2nd core.
    tb = 128 if (B_pad > 128 and B_pad % 128 == 0) else B_pad
    nb = B_pad // tb

    kernel = functools.partial(_rnn_seq_kernel, activation=act)
    cost = pl.CostEstimate(
        flops=2 * T * B_pad * Hp * Hp,
        transcendentals=(T * B_pad * Hp) if act == "tanh" else 0,
        bytes_accessed=(x_pre.size * 4
                        + wh.size * jnp.dtype(wh.dtype).itemsize
                        + h0_p.size * 4
                        + T * B_pad * Hp * jnp.dtype(out_dtype).itemsize))

    # TODO(synk): on v7x with very large Hp, request single-buffering for the
    # constant-index W_hh^T block (pipeline_mode=pl.Buffered(1)) to halve its
    # VMEM footprint; left at the default here to avoid relying on that
    # lowering path for small shapes.
    out = pl.pallas_call(
        kernel,
        out_shape=jax.ShapeDtypeStruct((T, B_pad, Hp), out_dtype),
        grid=(nb, T),
        in_specs=[
            pl.BlockSpec((1, tb, Hp), lambda b, t: (t, b, 0)),   # x_pre (streamed)
            pl.BlockSpec((tb, Hp), lambda b, t: (b, 0)),         # h0 per batch tile
            pl.BlockSpec((Hp, Hp), lambda b, t: (0, 0)),         # W_hh^T (resident)
        ],
        out_specs=pl.BlockSpec((1, tb, Hp), lambda b, t: (t, b, 0)),
        scratch_shapes=[pltpu.VMEM((tb, Hp), jnp.float32)],      # carried h (per core)
        compiler_params=pltpu.CompilerParams(
            dimension_semantics=("parallel", "arbitrary"),       # T is a recurrence
            vmem_limit_bytes=_VMEM_LIMIT_BYTES),
        cost_estimate=cost,
    )(x_pre, h0_p, wh)
    return out[:, :B, :H]


if __name__ == "__main__":
    B, INPUT_SIZE, HIDDEN_SIZE, T = 8, 16, 32, 8

    key = jax.random.PRNGKey(0)
    k_x, k_h, k_wxh, k_whh, k_bxh, k_bhh, k_seq = jax.random.split(key, 7)

    # Parameter init mirroring reset_parameters(): uniform(-std, std), std = 1/sqrt(H).
    std = 1.0 / jnp.sqrt(jnp.float32(HIDDEN_SIZE))
    w_xh = jax.random.uniform(k_wxh, (HIDDEN_SIZE, INPUT_SIZE), jnp.float32, -std, std)
    w_hh = jax.random.uniform(k_whh, (HIDDEN_SIZE, HIDDEN_SIZE), jnp.float32, -std, std)
    b_xh = jax.random.uniform(k_bxh, (HIDDEN_SIZE,), jnp.float32, -std, std)
    b_hh = jax.random.uniform(k_bhh, (HIDDEN_SIZE,), jnp.float32, -std, std)

    x = jax.random.normal(k_x, (B, INPUT_SIZE), jnp.float32)
    h = jax.random.normal(k_h, (B, HIDDEN_SIZE), jnp.float32)
    x_seq = jax.random.normal(k_seq, (T, B, INPUT_SIZE), jnp.float32)

    # ---- references ----
    ref = jnp.tanh(x @ w_xh.T + b_xh + h @ w_hh.T + b_hh)
    ref_no_h = jnp.tanh(x @ w_xh.T + b_xh + b_hh)
    ref_relu = jnp.maximum(x @ w_xh.T + b_xh + h @ w_hh.T + b_hh, 0.0)
    h_ref = h
    seq_refs = []
    for t in range(T):
        h_ref = jnp.tanh(x_seq[t] @ w_xh.T + b_xh + h_ref @ w_hh.T + b_hh)
        seq_refs.append(h_ref)
    seq_ref = jnp.stack(seq_refs)

    # ---- f32 compute dtype: exact semantics ----
    params_f32 = prepare_rnn_cell_params(w_xh, w_hh, b_xh, b_hh,
                                         nonlinearity="tanh",
                                         compute_dtype=jnp.float32)
    out = jax.block_until_ready(rnn_cell_forward(params_f32, x, h))
    out_no_h = jax.block_until_ready(rnn_cell_forward(params_f32, x, None))
    assert out.shape == (B, HIDDEN_SIZE)
    assert jnp.allclose(out, ref, atol=1e-4, rtol=1e-4)
    assert jnp.allclose(out_no_h, ref_no_h, atol=1e-4, rtol=1e-4)

    params_relu = prepare_rnn_cell_params(w_xh, w_hh, b_xh, b_hh,
                                          nonlinearity="relu",
                                          compute_dtype=jnp.float32)
    out_relu = jax.block_until_ready(rnn_cell_forward(params_relu, x, h))
    assert jnp.allclose(out_relu, ref_relu, atol=1e-4, rtol=1e-4)

    seq_out = jax.block_until_ready(rnn_sequence_forward(params_f32, x_seq, h))
    assert seq_out.shape == (T, B, HIDDEN_SIZE)
    assert jnp.allclose(seq_out, seq_ref, atol=1e-4, rtol=1e-4)

    # ---- default bf16 weights (f32 accumulate / bias / nonlinearity) ----
    params_bf16 = prepare_rnn_cell_params(w_xh, w_hh, b_xh, b_hh,
                                          nonlinearity="tanh")
    out_bf16 = jax.block_until_ready(rnn_cell_forward(params_bf16, x, h))
    assert jnp.allclose(out_bf16, ref, atol=2e-2, rtol=2e-2)

    # bf16 whole-sequence: recurrent recast rounding compounds over T, so use
    # a realistic T with a loose tolerance.
    seq_bf16 = jax.block_until_ready(rnn_sequence_forward(params_bf16, x_seq, h))
    assert seq_bf16.shape == (T, B, HIDDEN_SIZE)
    assert jnp.allclose(seq_bf16, seq_ref, atol=7e-2, rtol=7e-2)

    print("KERNEL_OK")
</pallas_src>

<mosaic_0001>
module attributes {stable_mosaic.version = 11 : i64} {
  func.func @_cell_kernel(%arg0: i32, %arg1: i32, %arg2: memref<8x16xf32, #tpu.memory_space<vmem>>, %arg3: memref<8x32xf32, #tpu.memory_space<vmem>>, %arg4: memref<16x128xf32, #tpu.memory_space<vmem>>, %arg5: memref<32x128xf32, #tpu.memory_space<vmem>>, %arg6: memref<1x128xf32, #tpu.memory_space<vmem>>, %arg7: memref<8x128xf32, #tpu.memory_space<vmem>>) attributes {dimension_semantics = [#tpu.dimension_semantics<parallel>, #tpu.dimension_semantics<parallel>], iteration_bounds = array<i64: 1, 1>, scalar_prefetch = 0 : i64, scratch_operands = 0 : i64, tpu.core_type = #tpu.core_type<tc>, window_params = [{transform_indices = @transform_0, window_bounds = array<i64: 8, 16>}, {transform_indices = @transform_1, window_bounds = array<i64: 8, 32>}, {transform_indices = @transform_2, window_bounds = array<i64: 16, 128>}, {transform_indices = @transform_3, window_bounds = array<i64: 32, 128>}, {transform_indices = @transform_4, window_bounds = array<i64: 1, 128>}, {transform_indices = @transform_5, window_bounds = array<i64: 8, 128>}]} {
    %c0 = arith.constant 0 : index
    %c0_0 = arith.constant 0 : index
    %0 = vector.load %arg2[%c0, %c0_0] : memref<8x16xf32, #tpu.memory_space<vmem>>, vector<8x16xf32>
    %c0_1 = arith.constant 0 : index
    %c0_2 = arith.constant 0 : index
    %1 = vector.load %arg4[%c0_1, %c0_2] : memref<16x128xf32, #tpu.memory_space<vmem>>, vector<16x128xf32>
    %cst = arith.constant dense<0.000000e+00> : vector<8x128xf32>
    %2 = tpu.matmul %0, %1, %cst {dimension_numbers = #tpu.dot_dimension_numbers<[1], [0], [0], [1], [0, 0, 1, 1], [], []>} : vector<8x16xf32>, vector<16x128xf32>, vector<8x128xf32> -> vector<8x128xf32>
    %c0_3 = arith.constant 0 : index
    %c0_4 = arith.constant 0 : index
    %3 = vector.load %arg3[%c0_3, %c0_4] : memref<8x32xf32, #tpu.memory_space<vmem>>, vector<8x32xf32>
    %c0_5 = arith.constant 0 : index
    %c0_6 = arith.constant 0 : index
    %4 = vector.load %arg5[%c0_5, %c0_6] : memref<32x128xf32, #tpu.memory_space<vmem>>, vector<32x128xf32>
    %cst_7 = arith.constant dense<0.000000e+00> : vector<8x128xf32>
    %5 = tpu.matmul %3, %4, %cst_7 {dimension_numbers = #tpu.dot_dimension_numbers<[1], [0], [0], [1], [0, 0, 1, 1], [], []>} : vector<8x32xf32>, vector<32x128xf32>, vector<8x128xf32> -> vector<8x128xf32>
    %6 = arith.addf %2, %5 : vector<8x128xf32>
    %c0_8 = arith.constant 0 : index
    %c0_9 = arith.constant 0 : index
    %7 = vector.load %arg6[%c0_8, %c0_9] : memref<1x128xf32, #tpu.memory_space<vmem>>, vector<1x128xf32>
    %8 = vector.broadcast %7 : vector<1x128xf32> to vector<8x128xf32>
    %9 = arith.addf %6, %8 : vector<8x128xf32>
    %10 = math.tanh %9 : vector<8x128xf32>
    %c0_10 = arith.constant 0 : index
    %c0_11 = arith.constant 0 : index
    %11 = vector.load %arg7[%c0_10, %c0_11] : memref<8x128xf32, #tpu.memory_space<vmem>>, vector<8x128xf32>
    tpu.vector_store %arg7[%c0_10, %c0_11], %10 {strides = array<i32>} : memref<8x128xf32, #tpu.memory_space<vmem>>, vector<8x128xf32>,
    return
  }
  func.func @transform_0(%arg0: i32, %arg1: i32) -> (i32, i32) {
    %c0_i32 = arith.constant 0 : i32
    %c0_i32_0 = arith.constant 0 : i32
    return %arg1, %c0_i32 : i32, i32
  }
  func.func @transform_1(%arg0: i32, %arg1: i32) -> (i32, i32) {
    %c0_i32 = arith.constant 0 : i32
    %c0_i32_0 = arith.constant 0 : i32
    return %arg1, %c0_i32 : i32, i32
  }
  func.func @transform_2(%arg0: i32, %arg1: i32) -> (i32, i32) {
    %c0_i32 = arith.constant 0 : i32
    %c0_i32_0 = arith.constant 0 : i32
    return %c0_i32, %arg0 : i32, i32
  }
  func.func @transform_3(%arg0: i32, %arg1: i32) -> (i32, i32) {
    %c0_i32 = arith.constant 0 : i32
    %c0_i32_0 = arith.constant 0 : i32
    return %c0_i32, %arg0 : i32, i32
  }
  func.func @transform_4(%arg0: i32, %arg1: i32) -> (i32, i32) {
    %c0_i32 = arith.constant 0 : i32
    %c0_i32_0 = arith.constant 0 : i32
    return %c0_i32, %arg0 : i32, i32
  }
  func.func @transform_5(%arg0: i32, %arg1: i32) -> (i32, i32) {
    %c0_i32 = arith.constant 0 : i32
    return %arg1, %arg0 : i32, i32
  }
}

</mosaic_0001>

<llo_original>
// kernel: tpu_custom_call.1
$region0: #{tpu_custom_call.1}
  #allocation0 [shape = 'u32[]', space=smem, size = 0x4, offset = 0x4, fixed_abs, tag = 'smem constant byte address 0x4 - core index']
  #allocation1 [shape = 'u32[144,128]{1,0:T(1,128)}', space=vmem, size = 0x12000, scoped, tag = 'internal scratch']
  %s0 = inlined_call_operand.hbm [shape: f32[8,16], index: 0, kind: input, shape index: {}]
  %s1 = inlined_call_operand.hbm [shape: f32[8,32], index: 1, kind: input, shape index: {}]
  %s2 = inlined_call_operand.hbm [shape: f32[16,128], index: 2, kind: input, shape index: {}]
  %s3 = inlined_call_operand.hbm [shape: f32[32,128], index: 3, kind: input, shape index: {}]
  %s4 = inlined_call_operand.vmem [shape: f32[1,128], index: 4, kind: input, shape index: {}]
  %s5 = inlined_call_operand.hbm [shape: f32[8,128], index: 5, kind: output, shape index: {}]
  %s6 = sld [smem:[#allocation0]]
  $region46: #{tpu_custom_call.1} parent=0
    _
  %s8 = ssub.s32 1, %s6
  %s9 = scalar_select 0, %s8, %s6
  $region1: #{tpu_custom_call.1} parent=0
    #allocation2 [shape = 'u8[4096]{0}', space=vmem, size = 0x1000, scoped, tag = 'input window, operand 0, single buffered']
    #allocation3 [shape = 's32[1]{0}', space=sflag, size = 0x4, scoped, tag = 'scoped memory for tpu_custom_call.1']
    #allocation4 [shape = 's32[1]{0}', space=sflag, size = 0x4, scoped, tag = 'scoped memory for tpu_custom_call.1']
    #allocation5 [shape = 'u8[4096]{0}', space=vmem, size = 0x1000, scoped, tag = 'input window, operand 1, single buffered']
    #allocation6 [shape = 's32[1]{0}', space=sflag, size = 0x4, scoped, tag = 'scoped memory for tpu_custom_call.1']
    #allocation7 [shape = 'u8[8192]{0}', space=vmem, size = 0x2000, scoped, tag = 'input window, operand 2, single buffered']
    #allocation8 [shape = 'u8[16384]{0}', space=vmem, size = 0x4000, scoped, tag = 'input window, operand 3, single buffered']
    #allocation9 [shape = 's32[1]{0}', space=sflag, size = 0x4, scoped, tag = 'scoped memory for tpu_custom_call.1']
    #allocation10 [shape = 'u8[4096]{0}', space=vmem, size = 0x1000, scoped, tag = 'output window, operand 0, single buffered']
    %10 = vsyncpa [#allocation3], 0
    %11 = vsyncpa [#allocation6], 0
    %12 = vsyncpa [#allocation9], 0
    %13 = vsyncpa [#allocation4], 0
    // Predicated region
    $region2: #{tpu_custom_call.1} parent=1 // pred_check
      _
    $region3: #{tpu_custom_call.1} parent=1 // pred_check_branch
      %15 = sbr.rel (0) target = $region5
    $region4: #{tpu_custom_call.1} parent=1 // pred_region
      %s17 = ssub.s32 128, 128
      %18 = vsyncadd [#allocation3], %s17
      %s20 = sshll.u32 [#allocation2], 4
      %s21 = int_to_ptr.vmem [resolvable:$true] %s20
      %23 = dma.hbm_to_vmem [thread:$0]  %s0, 128, %s21, [#allocation3]
    $region5: #{tpu_custom_call.1} parent=1 // pred_fallthru
      _
    // Predicated region
    $region6: #{tpu_custom_call.1} parent=1 // pred_check
      _
    $region7: #{tpu_custom_call.1} parent=1 // pred_check_branch
      %25 = sbr.rel (0) target = $region9
    $region8: #{tpu_custom_call.1} parent=1 // pred_region
      %s27 = ssub.s32 128, 128
      %28 = vsyncadd [#allocation6], %s27
      %s30 = sshll.u32 [#allocation5], 4
      %s31 = int_to_ptr.vmem [resolvable:$true] %s30
      %33 = dma.hbm_to_vmem [thread:$0]  %s1, 128, %s31, [#allocation6]
    $region9: #{tpu_custom_call.1} parent=1 // pred_fallthru
      _
    // Predicated region
    $region10: #{tpu_custom_call.1} parent=1 // pred_check
      _
    $region11: #{tpu_custom_call.1} parent=1 // pred_check_branch
      %35 = sbr.rel (0) target = $region13
    $region12: #{tpu_custom_call.1} parent=1 // pred_region
      %s37 = ssub.s32 256, 256
      %38 = vsyncadd [#allocation6], %s37
      %s39 = sshll.u32 [#allocation7], 4
      %s40 = int_to_ptr.vmem [resolvable:$true] %s39
      %45 = dma.hbm_to_vmem [thread:$0]  %s2, 256, %s40, [#allocation6], 128, 128, 8
    $region13: #{tpu_custom_call.1} parent=1 // pred_fallthru
      _
    // Predicated region
    $region14: #{tpu_custom_call.1} parent=1 // pred_check
      _
    $region15: #{tpu_custom_call.1} parent=1 // pred_check_branch
      %47 = sbr.rel (0) target = $region17
    $region16: #{tpu_custom_call.1} parent=1 // pred_region
      %s49 = ssub.s32 512, 512
      %50 = vsyncadd [#allocation9], %s49
      %s51 = sshll.u32 [#allocation8], 4
      %s52 = int_to_ptr.vmem [resolvable:$true] %s51
      %57 = dma.hbm_to_vmem [thread:$0]  %s3, 512, %s52, [#allocation9], 128, 128, 8
    $region17: #{tpu_custom_call.1} parent=1 // pred_fallthru
      _
    // Predicated region
    $region18: #{tpu_custom_call.1} parent=1 // pred_check
      _
    $region19: #{tpu_custom_call.1} parent=1 // pred_check_branch
      %59 = sbr.rel (0) target = $region21
    $region20: #{tpu_custom_call.1} parent=1 // pred_region
      _
    $region21: #{tpu_custom_call.1} parent=1 // pred_fallthru
      _
    // Predicated region
    $region22: #{tpu_custom_call.1} parent=1 // pred_check
      _
    $region23: #{tpu_custom_call.1} parent=1 // pred_check_branch
      %61 = sbr.rel (0) target = $region25
    $region24: #{tpu_custom_call.1} parent=1 // pred_region
      %62 = dma.done [#allocation3], 128
    $region25: #{tpu_custom_call.1} parent=1 // pred_fallthru
      _
    // Predicated region
    $region26: #{tpu_custom_call.1} parent=1 // pred_check
      _
    $region27: #{tpu_custom_call.1} parent=1 // pred_check_branch
      %64 = sbr.rel (0) target = $region29
    $region28: #{tpu_custom_call.1} parent=1 // pred_region
      %65 = dma.done [#allocation6], 128
    $region29: #{tpu_custom_call.1} parent=1 // pred_fallthru
      _
    // Predicated region
    $region30: #{tpu_custom_call.1} parent=1 // pred_check
      _
    $region31: #{tpu_custom_call.1} parent=1 // pred_check_branch
      %67 = sbr.rel (0) target = $region33
    $region32: #{tpu_custom_call.1} parent=1 // pred_region
      %68 = dma.done [#allocation6], 256
    $region33: #{tpu_custom_call.1} parent=1 // pred_fallthru
      _
    // Predicated region
    $region34: #{tpu_custom_call.1} parent=1 // pred_check
      _
    $region35: #{tpu_custom_call.1} parent=1 // pred_check_branch
      %70 = sbr.rel (0) target = $region37
    $region36: #{tpu_custom_call.1} parent=1 // pred_region
      %71 = dma.done [#allocation9], 512
    $region37: #{tpu_custom_call.1} parent=1 // pred_fallthru
      _
    %v72 = vld [vmem:[#allocation2] sm:$0xff]
    %v73 = vld [vmem:[#allocation7] sm:$0xff]
    %v74 = vld [vmem:[#allocation7 + $0x8] sm:$0xff]
    %v75 = vld [vmem:[#allocation5] sm:$0xff]
    %v76 = vld [vmem:[#allocation8] sm:$0xff]
    %v77 = vld [vmem:[#allocation8 + $0x8] sm:$0xff]
    %v78 = vld [vmem:[#allocation8 + $0x10] sm:$0xff]
    %v79 = vld [vmem:[#allocation8 + $0x18] sm:$0xff]
    %vm80 = vcmask 261120
    %v82 = vsel %vm80, %v75, 0
    %84 = vmatprep.subr.mxu0 0.0
    %85 = vmatpush1.msra.mxu0 %v76
    %86 = vmatprep.subr.mxu0 0.0
    %87 = vmatpush1.msra.mxu0 %v77
    %88 = vmatprep.subr.mxu0 0.0
    %89 = vmatpush1.msra.mxu0 %v78
    %90 = vmatprep.subr.mxu0 0.0
    %91 = vmatpush1.msra.mxu0 %v79
    %92 = vmatprep.subr.mxu0 0.0
    %93 = vmatpush1.msra.mxu0 0.0
    %94 = vmatprep.subr.mxu0 0.0
    %95 = vmatpush1.msra.mxu0 0.0
    %96 = vmatprep.subr.mxu0 0.0
    %97 = vmatpush1.msra.mxu0 0.0
    %98 = vmatprep.subr.mxu0 0.0
    %99 = vmatpush1.msra.mxu0 0.0
    %100 = vmatprep.subr.mxu0 0.0
    %101 = vmatpush1.msra.mxu0 0.0
    %102 = vmatprep.subr.mxu0 0.0
    %103 = vmatpush1.msra.mxu0 0.0
    %104 = vmatprep.subr.mxu0 0.0
    %105 = vmatpush1.msra.mxu0 0.0
    %106 = vmatprep.subr.mxu0 0.0
    %107 = vmatpush1.msra.mxu0 0.0
    %108 = vmatprep.subr.mxu0 0.0
    %109 = vmatpush1.msra.mxu0 0.0
    %110 = vmatprep.subr.mxu0 0.0
    %111 = vmatpush1.msra.mxu0 0.0
    %112 = vmatprep.subr.mxu0 0.0
    %113 = vmatpush1.msra.mxu0 0.0
    %114 = vmatprep.subr.mxu0 0.0
    %115 = vmatpush1.msra.mxu0 0.0
    %116 = vmatprep.subr.mxu0 0.0
    %117 = vmatpush1.msra.mxu0 0.0
    %118 = vmatprep.subr.mxu0 0.0
    %119 = vmatpush1.msra.mxu0 0.0
    %120 = vmatprep.subr.mxu0 0.0
    %121 = vmatpush1.msra.mxu0 0.0
    %122 = vmatprep.subr.mxu0 0.0
    %123 = vmatpush1.msra.mxu0 0.0
    %124 = vmatprep.subr.mxu0 0.0
    %125 = vmatpush1.msra.mxu0 0.0
    %126 = vmatprep.subr.mxu0 0.0
    %127 = vmatpush1.msra.mxu0 0.0
    %128 = vmatprep.subr.mxu0 0.0
    %129 = vmatpush1.msra.mxu0 0.0
    %130 = vmatprep.subr.mxu0 0.0
    %131 = vmatpush1.msra.mxu0 0.0
    %132 = vmatprep.subr.mxu0 0.0
    %133 = vmatpush1.msra.mxu0 0.0
    %134 = vmatprep.subr.mxu0 0.0
    %135 = vmatpush1.msra.mxu0 0.0
    %136 = vmatprep.subr.mxu0 0.0
    %137 = vmatpush1.msra.mxu0 0.0
    %138 = vmatprep.subr.mxu0 0.0
    %139 = vmatpush1.msra.mxu0 0.0
    %140 = vmatprep.subr.mxu0 0.0
    %141 = vmatpush1.msra.mxu0 0.0
    %142 = vmatprep.subr.mxu0 0.0
    %143 = vmatpush1.msra.mxu0 0.0
    %144 = vmatprep.subr.mxu0 0.0
    %145 = vmatpush1.msra.mxu0 0.0
    %146 = vmatprep.subr.mxu0 0.0
    %147 = vmatpush1.msra.mxu0 0.0
    %148 = vmatprep.mubr.f32.mxu0 0.0
    %149 = vmatmul.mubr.f32.gmra.mrb[0].mxu0 %v82
    %v150 = vpop.f32.mrb[0].mxu0
    %v151 = vadd.f32 0.0, %v150
    %v152 = vpop.f32.mrb[0].mxu0
    %153 = vdwg.mxu0
    %vm154 = vcmask 130048
    %v156 = vsel %vm154, %v72, 0
    %158 = vmatprep.subr.mxu0 0.0
    %159 = vmatpush1.msra.mxu0 %v73
    %160 = vmatprep.subr.mxu0 0.0
    %161 = vmatpush1.msra.mxu0 %v74
    %162 = vmatprep.subr.mxu0 0.0
    %163 = vmatpush1.msra.mxu0 0.0
    %164 = vmatprep.subr.mxu0 0.0
    %165 = vmatpush1.msra.mxu0 0.0
    %166 = vmatprep.subr.mxu0 0.0
    %167 = vmatpush1.msra.mxu0 0.0
    %168 = vmatprep.subr.mxu0 0.0
    %169 = vmatpush1.msra.mxu0 0.0
    %170 = vmatprep.subr.mxu0 0.0
    %171 = vmatpush1.msra.mxu0 0.0
    %172 = vmatprep.subr.mxu0 0.0
    %173 = vmatpush1.msra.mxu0 0.0
    %174 = vmatprep.subr.mxu0 0.0
    %175 = vmatpush1.msra.mxu0 0.0
    %176 = vmatprep.subr.mxu0 0.0
    %177 = vmatpush1.msra.mxu0 0.0
    %178 = vmatprep.subr.mxu0 0.0
    %179 = vmatpush1.msra.mxu0 0.0
    %180 = vmatprep.subr.mxu0 0.0
    %181 = vmatpush1.msra.mxu0 0.0
    %182 = vmatprep.subr.mxu0 0.0
    %183 = vmatpush1.msra.mxu0 0.0
    %184 = vmatprep.subr.mxu0 0.0
    %185 = vmatpush1.msra.mxu0 0.0
    %186 = vmatprep.subr.mxu0 0.0
    %187 = vmatpush1.msra.mxu0 0.0
    %188 = vmatprep.subr.mxu0 0.0
    %189 = vmatpush1.msra.mxu0 0.0
    %190 = vmatprep.subr.mxu0 0.0
    %191 = vmatpush1.msra.mxu0 0.0
    %192 = vmatprep.subr.mxu0 0.0
    %193 = vmatpush1.msra.mxu0 0.0
    %194 = vmatprep.subr.mxu0 0.0
    %195 = vmatpush1.msra.mxu0 0.0
    %196 = vmatprep.subr.mxu0 0.0
    %197 = vmatpush1.msra.mxu0 0.0
    %198 = vmatprep.subr.mxu0 0.0
    %199 = vmatpush1.msra.mxu0 0.0
    %200 = vmatprep.subr.mxu0 0.0
    %201 = vmatpush1.msra.mxu0 0.0
    %202 = vmatprep.subr.mxu0 0.0
    %203 = vmatpush1.msra.mxu0 0.0
    %204 = vmatprep.subr.mxu0 0.0
    %205 = vmatpush1.msra.mxu0 0.0
    %206 = vmatprep.subr.mxu0 0.0
    %207 = vmatpush1.msra.mxu0 0.0
    %208 = vmatprep.subr.mxu0 0.0
    %209 = vmatpush1.msra.mxu0 0.0
    %210 = vmatprep.subr.mxu0 0.0
    %211 = vmatpush1.msra.mxu0 0.0
    %212 = vmatprep.subr.mxu0 0.0
    %213 = vmatpush1.msra.mxu0 0.0
    %214 = vmatprep.subr.mxu0 0.0
    %215 = vmatpush1.msra.mxu0 0.0
    %216 = vmatprep.subr.mxu0 0.0
    %217 = vmatpush1.msra.mxu0 0.0
    %218 = vmatprep.subr.mxu0 0.0
    %219 = vmatpush1.msra.mxu0 0.0
    %220 = vmatprep.subr.mxu0 0.0
    %221 = vmatpush1.msra.mxu0 0.0
    %222 = vmatprep.mubr.f32.mxu0 0.0
    %223 = vmatmul.mubr.f32.gmra.mrb[0].mxu0 %v156
    %v224 = vpop.f32.mrb[0].mxu0
    %v225 = vadd.f32 %v151, %v224
    %v226 = vpop.f32.mrb[0].mxu0
    %227 = vdwg.mxu0
    %v228 = vld [vmem:[%s4] sm:$0x1]
    %v230 = vlaneseq
    %v231 = vshrl.u32 %v230, 7
    %v232 = vsub.s32 0, %v231
    %v233 = vrot.slane %v228, %v232
    %v235 = vadd.f32 %v225, %v233
    %v236 = vtanh.pop %v235
    %237 = vst [vmem:[#allocation10] sm:$0xff] %v236
    // Predicated region
    $region38: #{tpu_custom_call.1} parent=1 // pred_check
      _
    $region39: #{tpu_custom_call.1} parent=1 // pred_check_branch
      %239 = sbr.rel (0) target = $region41
    $region40: #{tpu_custom_call.1} parent=1 // pred_region
      %s241 = ssub.s32 128, 128
      %242 = vsyncadd [#allocation4], %s241
      %s244 = sshll.u32 [#allocation10], 4
      %s245 = int_to_ptr.vmem [resolvable:$true] %s244
      %247 = dma.vmem_to_hbm [thread:$0]  %s245, 128, %s5, [#allocation4]
    $region41: #{tpu_custom_call.1} parent=1 // pred_fallthru
      _
    // Predicated region
    $region42: #{tpu_custom_call.1} parent=1 // pred_check
      _
    $region43: #{tpu_custom_call.1} parent=1 // pred_check_branch
      %249 = sbr.rel (0) target = $region45
    $region44: #{tpu_custom_call.1} parent=1 // pred_region
      %250 = dma.done [#allocation4], 128
    $region45: #{tpu_custom_call.1} parent=1 // pred_fallthru
      _
    %251 = vsyncpa [#allocation3], 1
    %252 = vsyncpa [#allocation6], 1
    %253 = vsyncpa [#allocation9], 1
    %254 = vsyncpa [#allocation4], 1

</llo_original>
